<compile_context>
chip_gen: v5e
topology: v5e:2x2
jax: 0.10.0
libtpu: 0.0.40
codegen_flags: <defaults>
</compile_context>

<pallas_src>
import functools

import jax
import jax.numpy as jnp
from jax.experimental import pallas as pl
from jax.experimental.pallas import tpu as pltpu


def _round_up(x: int, m: int) -> int:
    return ((x + m - 1) // m) * m


def _vmem_budget_bytes() -> int:
    """Per-generation VMEM budget with headroom (v7x: 64 MiB, v5e/v6e: 128 MiB)."""
    cap = None
    try:
        cap = getattr(pltpu.get_tpu_info(), "vmem_capacity_bytes", None)
    except Exception:
        cap = None
    if not cap:
        cap = 64 * 1024 * 1024  # conservative floor (v7x per-TC VMEM)
    return min(int(cap) * 3 // 4, 96 * 1024 * 1024)


def _estimate_vmem(tm, tk, in_dim_pad, out_dim, rank_pad, out_bytes):
    x_tile = 2 * tm * tk * 4                  # double-buffered f32 x tile
    a_res = 2 * in_dim_pad * rank_pad * 2     # resident bf16 A (conservative x2)
    b_res = 2 * rank_pad * out_dim * 2        # resident bf16 B (conservative x2)
    o_tile = 2 * tm * out_dim * out_bytes     # double-buffered output tile
    acc = tm * rank_pad * 4                   # f32 accumulator scratch
    return x_tile + a_res + b_res + o_tile + acc


def _choose_tiles(batch, in_dim, out_dim, rank_pad, out_bytes, budget,
                  tm_target, tk_target):
    tm = min(tm_target, _round_up(batch, 8))
    # Keep >= 2 batch blocks when possible so the "parallel" axis can split
    # across v7x's two TensorCores.
    if batch > 8 and _round_up(batch, tm) // tm < 2:
        tm = _round_up(-(-batch // 2), 8)
    tk = min(tk_target, _round_up(in_dim, 128))
    while True:
        in_dim_pad = _round_up(in_dim, tk)
        if _estimate_vmem(tm, tk, in_dim_pad, out_dim, rank_pad, out_bytes) <= budget:
            break
        if tk > 128:
            tk = _round_up(tk // 2, 128)
        elif tm > 8:
            tm = _round_up(tm // 2, 8)
        else:
            break
    return tm, tk


def make_lora_kernel(alpha: float, tk: int):
    def lora_kernel(x_ref, a_ref, b_ref, o_ref, acc_ref):
        k = pl.program_id(1)

        @pl.when(k == 0)
        def _():
            acc_ref[...] = jnp.zeros_like(acc_ref)

        # In-kernel cast of the streamed f32 x tile (VPU slack; avoids an extra
        # wrapper-side HBM pass over x).
        xt = x_ref[...].astype(jnp.bfloat16)
        # A is fully VMEM-resident; slice this step's K sliver.
        k0 = pl.multiple_of(k * tk, tk)
        a_sliver = a_ref[pl.ds(k0, tk), :]
        # First matmul: accumulate xa = x @ A across the in_dim (K) grid axis.
        acc_ref[...] += jnp.dot(xt, a_sliver, preferred_element_type=jnp.float32)

        @pl.when(k == pl.num_programs(1) - 1)
        def _():
            # alpha applied on the rank-sized intermediate (f32 elementwise),
            # then cast to bf16 for the second MXU matmul against resident B.
            xa = (alpha * acc_ref[...]).astype(b_ref.dtype)
            o_ref[...] = jnp.dot(
                xa, b_ref[...], preferred_element_type=jnp.float32
            ).astype(o_ref.dtype)

    return lora_kernel


@functools.partial(jax.jit, static_argnames=("alpha", "tm_target", "tk_target"))
def lora_forward(x, A, B, alpha, *, tm_target=512, tk_target=1024):
    batch, in_dim = x.shape
    in_dim_a, rank = A.shape
    rank_b, out_dim = B.shape
    assert in_dim == in_dim_a and rank == rank_b

    out_dtype = x.dtype
    out_bytes = jnp.dtype(out_dtype).itemsize

    # Pad rank to a lane-dense multiple of 128 (masked-store / MXU-occupancy fix).
    rank_pad = max(128, _round_up(rank, 128))

    budget = _vmem_budget_bytes()
    tm, tk = _choose_tiles(batch, in_dim, out_dim, rank_pad, out_bytes, budget,
                           tm_target, tk_target)
    batch_pad = _round_up(batch, tm)
    in_dim_pad = _round_up(in_dim, tk)
    grid = (batch_pad // tm, in_dim_pad // tk)

    # Zero-pad ragged dims (zeros contribute nothing to the matmuls).
    if batch_pad != batch or in_dim_pad != in_dim:
        x = jnp.pad(x, ((0, batch_pad - batch), (0, in_dim_pad - in_dim)))
    # A/B are tiny; pad + cast to bf16 in the wrapper is negligible traffic.
    Ab = jnp.pad(A.astype(jnp.bfloat16),
                 ((0, in_dim_pad - in_dim), (0, rank_pad - rank)))
    Bb = jnp.pad(B.astype(jnp.bfloat16), ((0, rank_pad - rank), (0, 0)))

    y = pl.pallas_call(
        make_lora_kernel(float(alpha), tk),
        out_shape=jax.ShapeDtypeStruct((batch_pad, out_dim), out_dtype),
        grid_spec=pltpu.PrefetchScalarGridSpec(
            num_scalar_prefetch=0,
            grid=grid,
            in_specs=[
                # x: streamed f32 tiles (cast to bf16 in-kernel).
                pl.BlockSpec((tm, tk), lambda i, k: (i, k)),
                # A: fully VMEM-resident, fetched once.
                pl.BlockSpec((in_dim_pad, rank_pad), lambda i, k: (0, 0)),
                # B: VMEM-resident.
                pl.BlockSpec((rank_pad, out_dim), lambda i, k: (0, 0)),
            ],
            out_specs=pl.BlockSpec((tm, out_dim), lambda i, k: (i, 0)),
            scratch_shapes=[pltpu.VMEM((tm, rank_pad), jnp.float32)],
        ),
        compiler_params=pltpu.CompilerParams(
            dimension_semantics=("parallel", "arbitrary"),
            vmem_limit_bytes=budget,
        ),
    )(x, Ab, Bb)

    return y[:batch] if batch_pad != batch else y


if __name__ == "__main__":
    # Small but tile-friendly, lane-dense shapes (out_dim multiple of 128).
    batch, in_dim, out_dim, rank = 256, 512, 256, 8
    alpha = 2.0

    key = jax.random.PRNGKey(0)
    kx, ka, kb = jax.random.split(key, 3)

    # A init mirrors LoRALayer.__init__: rand(in_dim, rank) * (1/sqrt(rank)).
    std_dev = 1.0 / jnp.sqrt(jnp.float32(rank))
    A = jax.random.uniform(ka, (in_dim, rank), dtype=jnp.float32) * std_dev
    # LoRA init uses B = zeros, but that hides indexing/math bugs; the main
    # correctness check uses a random nonzero B, the zero-B path is checked too.
    B_zero = jnp.zeros((rank, out_dim), dtype=jnp.float32)
    B = jax.random.normal(kb, (rank, out_dim), dtype=jnp.float32)
    x = jax.random.normal(kx, (batch, in_dim), dtype=jnp.float32)

    y = jax.block_until_ready(lora_forward(x, A, B, alpha))

    # Reference: same bf16-quantized operands, f32 math. The kernel additionally
    # casts the rank-sized intermediate to bf16, so use a loose tolerance.
    xq = x.astype(jnp.bfloat16).astype(jnp.float32)
    Aq = A.astype(jnp.bfloat16).astype(jnp.float32)
    Bq = B.astype(jnp.bfloat16).astype(jnp.float32)
    y_ref = alpha * (xq @ Aq @ Bq)

    assert y.shape == (batch, out_dim) and y.dtype == x.dtype
    rel_err = jnp.max(jnp.abs(y - y_ref)) / (jnp.max(jnp.abs(y_ref)) + 1e-6)
    assert rel_err < 2e-2, f"relative error too large: {rel_err}"

    # LoRA-init path (B == 0) must give exactly zeros.
    y0 = jax.block_until_ready(lora_forward(x, A, B_zero, alpha))
    assert jnp.all(y0 == 0.0)

    print("KERNEL_OK")
</pallas_src>

<mosaic_0001>
module attributes {stable_mosaic.version = 11 : i64} {
  func.func @lora_kernel(%arg0: i32, %arg1: i32, %arg2: memref<128x512xf32, #tpu.memory_space<vmem>>, %arg3: memref<512x128xbf16, #tpu.memory_space<vmem>>, %arg4: memref<128x256xbf16, #tpu.memory_space<vmem>>, %arg5: memref<128x256xf32, #tpu.memory_space<vmem>>, %arg6: memref<128x128xf32, #tpu.memory_space<vmem>>) attributes {dimension_semantics = [#tpu.dimension_semantics<parallel>, #tpu.dimension_semantics<arbitrary>], iteration_bounds = array<i64: 2, 1>, scalar_prefetch = 0 : i64, scratch_operands = 1 : i64, tpu.core_type = #tpu.core_type<tc>, window_params = [{transform_indices = @transform_0, window_bounds = array<i64: 128, 512>}, {pipeline_mode = #tpu.pipeline_mode<synchronous>, transform_indices = @transform_1, window_bounds = array<i64: 512, 128>}, {pipeline_mode = #tpu.pipeline_mode<synchronous>, transform_indices = @transform_2, window_bounds = array<i64: 128, 256>}, {transform_indices = @transform_3, window_bounds = array<i64: 128, 256>}]} {
    %c0_i32 = arith.constant 0 : i32
    %0 = arith.cmpi eq, %arg1, %c0_i32 : i32
    %1 = arith.extui %0 : i1 to i32
    %c0_i32_0 = arith.constant 0 : i32
    %2 = arith.cmpi ne, %1, %c0_i32_0 : i32
    scf.if %2 {
      %cst_9 = arith.constant 0.000000e+00 : f32
      %16 = vector.broadcast %cst_9 : f32 to vector<128x128xf32>
      %c0_10 = arith.constant 0 : index
      %c0_11 = arith.constant 0 : index
      %17 = vector.load %arg6[%c0_10, %c0_11] : memref<128x128xf32, #tpu.memory_space<vmem>>, vector<128x128xf32>
      tpu.vector_store %arg6[%c0_10, %c0_11], %16 {strides = array<i32>} : memref<128x128xf32, #tpu.memory_space<vmem>>, vector<128x128xf32>,
    } else {
    }
    %c0 = arith.constant 0 : index
    %c0_1 = arith.constant 0 : index
    %3 = vector.load %arg2[%c0, %c0_1] : memref<128x512xf32, #tpu.memory_space<vmem>>, vector<128x512xf32>
    %4 = arith.truncf %3 : vector<128x512xf32> to vector<128x512xbf16>
    %c512_i32 = arith.constant 512 : i32
    %5 = arith.muli %arg1, %c512_i32 : i32
    %6 = tpu.assume_multiple %5, 512 : i32
    %7 = arith.index_cast %6 : i32 to index
    %c0_2 = arith.constant 0 : index
    %8 = vector.load %arg3[%7, %c0_2] : memref<512x128xbf16, #tpu.memory_space<vmem>>, vector<512x128xbf16>
    %c0_3 = arith.constant 0 : index
    %c0_4 = arith.constant 0 : index
    %9 = vector.load %arg6[%c0_3, %c0_4] : memref<128x128xf32, #tpu.memory_space<vmem>>, vector<128x128xf32>
    %cst = arith.constant dense<0.000000e+00> : vector<128x128xf32>
    %10 = tpu.matmul %4, %8, %cst {dimension_numbers = #tpu.dot_dimension_numbers<[1], [0], [0], [1], [0, 0, 1, 1], [], []>} : vector<128x512xbf16>, vector<512x128xbf16>, vector<128x128xf32> -> vector<128x128xf32>
    %11 = arith.addf %9, %10 : vector<128x128xf32>
    %c0_5 = arith.constant 0 : index
    %c0_6 = arith.constant 0 : index
    %12 = vector.load %arg6[%c0_5, %c0_6] : memref<128x128xf32, #tpu.memory_space<vmem>>, vector<128x128xf32>
    tpu.vector_store %arg6[%c0_5, %c0_6], %11 {strides = array<i32>} : memref<128x128xf32, #tpu.memory_space<vmem>>, vector<128x128xf32>,
    %c0_i32_7 = arith.constant 0 : i32
    %13 = arith.cmpi eq, %arg1, %c0_i32_7 : i32
    %14 = arith.extui %13 : i1 to i32
    %c0_i32_8 = arith.constant 0 : i32
    %15 = arith.cmpi ne, %14, %c0_i32_8 : i32
    scf.if %15 {
      %c0_9 = arith.constant 0 : index
      %c0_10 = arith.constant 0 : index
      %16 = vector.load %arg6[%c0_9, %c0_10] : memref<128x128xf32, #tpu.memory_space<vmem>>, vector<128x128xf32>
      %cst_11 = arith.constant 2.000000e+00 : f32
      %17 = vector.broadcast %cst_11 : f32 to vector<128x128xf32>
      %18 = arith.mulf %17, %16 : vector<128x128xf32>
      %19 = arith.truncf %18 : vector<128x128xf32> to vector<128x128xbf16>
      %c0_12 = arith.constant 0 : index
      %c0_13 = arith.constant 0 : index
      %20 = vector.load %arg4[%c0_12, %c0_13] : memref<128x256xbf16, #tpu.memory_space<vmem>>, vector<128x256xbf16>
      %cst_14 = arith.constant dense<0.000000e+00> : vector<128x256xf32>
      %21 = tpu.matmul %19, %20, %cst_14 {dimension_numbers = #tpu.dot_dimension_numbers<[1], [0], [0], [1], [0, 0, 1, 1], [], []>} : vector<128x128xbf16>, vector<128x256xbf16>, vector<128x256xf32> -> vector<128x256xf32>
      %c0_15 = arith.constant 0 : index
      %c0_16 = arith.constant 0 : index
      %22 = vector.load %arg5[%c0_15, %c0_16] : memref<128x256xf32, #tpu.memory_space<vmem>>, vector<128x256xf32>
      tpu.vector_store %arg5[%c0_15, %c0_16], %21 {strides = array<i32>} : memref<128x256xf32, #tpu.memory_space<vmem>>, vector<128x256xf32>,
    } else {
    }
    return
  }
  func.func @transform_0(%arg0: i32, %arg1: i32) -> (i32, i32) {
    %c0_i32 = arith.constant 0 : i32
    return %arg0, %arg1 : i32, i32
  }
  func.func @transform_1(%arg0: i32, %arg1: i32) -> (i32, i32) {
    %c0_i32 = arith.constant 0 : i32
    %c0_i32_0 = arith.constant 0 : i32
    %c0_i32_1 = arith.constant 0 : i32
    return %c0_i32, %c0_i32_0 : i32, i32
  }
  func.func @transform_2(%arg0: i32, %arg1: i32) -> (i32, i32) {
    %c0_i32 = arith.constant 0 : i32
    %c0_i32_0 = arith.constant 0 : i32
    %c0_i32_1 = arith.constant 0 : i32
    return %c0_i32, %c0_i32_0 : i32, i32
  }
  func.func @transform_3(%arg0: i32, %arg1: i32) -> (i32, i32) {
    %c0_i32 = arith.constant 0 : i32
    %c0_i32_0 = arith.constant 0 : i32
    return %arg0, %c0_i32 : i32, i32
  }
}

</mosaic_0001>

<llo_original>
// kernel: lora_forward.1
$region0: #{lora_forward.1}
  #allocation0 [shape = 'u32[]', space=smem, size = 0x4, offset = 0x4, fixed_abs, tag = 'smem constant byte address 0x4 - core index']
  #allocation1 [shape = 'u32[72,128]{1,0:T(1,128)}', space=vmem, size = 0x9000, scoped, tag = 'internal scratch']
  #allocation2 [shape = 'f32[128,128]{1,0:T(8,128)}', space=vmem, size = 0x10000, scoped, tag = 'scratch operand']
  %s0 = inlined_call_operand.hbm [shape: f32[256,512], index: 0, kind: input, shape index: {}]
  %s1 = inlined_call_operand.vmem [shape: bf16[512,128], index: 1, kind: input, shape index: {}]
  %s2 = inlined_call_operand.vmem [shape: bf16[128,256], index: 2, kind: input, shape index: {}]
  %s3 = inlined_call_operand.hbm [shape: f32[256,256], index: 3, kind: output, shape index: {}]
  %s4 = sld [smem:[#allocation0]]
  $region57: #{lora_forward.1} parent=0
    _
  %s6 = ssub.s32 1, %s4
  %s7 = scalar_select 0, %s6, %s4
  $region1: #{lora_forward.1} parent=0
    #allocation3 [shape = 'u8[524288]{0}', space=vmem, size = 0x80000, scoped, tag = 'input window, operand 0']
    #allocation4 [shape = 's32[2]{0}', space=sflag, size = 0x8, scoped, tag = 'scoped memory for lora_forward.1']
    #allocation5 [shape = 's32[2]{0}', space=sflag, size = 0x8, scoped, tag = 'scoped memory for lora_forward.1']
    #allocation6 [shape = 'u8[262144]{0}', space=vmem, size = 0x40000, scoped, tag = 'output window, operand 0']
    %8 = vsyncpa [#allocation4], 0
    %s9 = scalar_lea.sflag [#allocation4], 1
    %10 = vsyncpa %s9, 0
    %11 = vsyncpa [#allocation5], 0
    %s12 = scalar_lea.sflag [#allocation5], 1
    %13 = vsyncpa %s12, 0
    loop: start=0, step=1, limit=4
    $region2: #{lora_forward.1} parent=1 // loop_pre_header
      _
    $region3: #{lora_forward.1} parent=1 // loop_header
      %s15 = sphi 0, %s19
      %p16 = scmp.ge.s32.totalorder %s15, 4
      %s22 = sphi 0, %s34
      %s23 = sphi 0, %s30
      %s24 = sphi 0, %s22
      %s25 = sphi 0, %s23
      %s26 = sphi 0, %s24
      %s27 = sphi 0, %s25
      %s39 = sphi 0, %s41
      %s42 = sphi 0, %s39
      %s43 = sphi 0, %s42
      %s59 = sphi 0, %s43
      %s63 = sphi 0, %s63
      %s65 = sphi 0, %s63
      %s66 = sphi 0, %s65
      %s80 = sphi 0, %s66
      %s84 = sphi 0, %s84
      %s86 = sphi 0, %s84
      %s87 = sphi 0, %s86
      %s101 = sphi 0, %s87
      %s107 = sphi 0, %s109
      %s110 = sphi 0, %s107
      %s111 = sphi 0, %s110
      %s127 = sphi 0, %s111
    $region4: #{lora_forward.1} parent=1 // loop_header_branch
      %18 = sbr.rel (%p16) target = $region8
    $region5: #{lora_forward.1} parent=1 // loop_body
      %s20 = ssub.s32 %s15, 1
      %s21 = ssub.s32 %s15, 2
      %s28 = sadd.s32 1, %s23
      %p29 = scmp.ge.s32.totalorder %s28, 1
      %s30 = scalar_select %p29, 0, %s28
      %s31 = sadd.s32 1, %s22
      %s32 = scalar_select %p29, %s31, %s22
      %p33 = scmp.ge.s32.totalorder %s32, 2
      %s34 = scalar_select %p33, 0, %s32
      %s35 = ssub.s32 %s22, %s34
      %s36 = ssub.s32 %s23, %s30
      %s37 = sor.u32 %s35, %s36
      %p38 = scmp.eq.s32.totalorder %s37, 0
      %s40 = sadd.s32 %s39, 1
      %s41 = scalar_select %p38, %s39, %s40
      %p44 = pneg %p38
      %p45 = scmp.eq.s32.totalorder %s15, 1
      %p46 = por %p44, %p45
      %p47 = scmp.ne.s32.totalorder %s39, %s42
      %p48 = scmp.eq.s32.totalorder %s15, 0
      %p49 = por %p47, %p48
      %p50 = scmp.ne.s32.totalorder %s39, %s42
      %p51 = scmp.eq.s32.totalorder %s20, 1
      %p52 = por %p50, %p51
      %p53 = scmp.ne.s32.totalorder %s42, %s43
      %p54 = scmp.eq.s32.totalorder %s20, 0
      %p55 = por %p53, %p54
      %p56 = scmp.ne.s32.totalorder %s42, %s43
      %p57 = scmp.eq.s32.totalorder %s21, 1
      %p58 = por %p56, %p57
      %p60 = scmp.ne.s32.totalorder %s43, %s59
      %p61 = scmp.eq.s32.totalorder %s21, 0
      %p62 = por %p60, %p61
      %s64 = sadd.s32 %s63, 1
      %p67 = scmp.eq.s32.totalorder %s15, 1
      %p68 = scmp.ne.s32.totalorder %s63, %s65
      %p69 = scmp.eq.s32.totalorder %s15, 0
      %p70 = por %p68, %p69
      %p71 = scmp.ne.s32.totalorder %s63, %s65
      %p72 = scmp.eq.s32.totalorder %s20, 1
      %p73 = por %p71, %p72
      %p74 = scmp.ne.s32.totalorder %s65, %s66
      %p75 = scmp.eq.s32.totalorder %s20, 0
      %p76 = por %p74, %p75
      %p77 = scmp.ne.s32.totalorder %s65, %s66
      %p78 = scmp.eq.s32.totalorder %s21, 1
      %p79 = por %p77, %p78
      %p81 = scmp.ne.s32.totalorder %s66, %s80
      %p82 = scmp.eq.s32.totalorder %s21, 0
      %p83 = por %p81, %p82
      %s85 = sadd.s32 %s84, 1
      %p88 = scmp.eq.s32.totalorder %s15, 1
      %p89 = scmp.ne.s32.totalorder %s84, %s86
      %p90 = scmp.eq.s32.totalorder %s15, 0
      %p91 = por %p89, %p90
      %p92 = scmp.ne.s32.totalorder %s84, %s86
      %p93 = scmp.eq.s32.totalorder %s20, 1
      %p94 = por %p92, %p93
      %p95 = scmp.ne.s32.totalorder %s86, %s87
      %p96 = scmp.eq.s32.totalorder %s20, 0
      %p97 = por %p95, %p96
      %p98 = scmp.ne.s32.totalorder %s86, %s87
      %p99 = scmp.eq.s32.totalorder %s21, 1
      %p100 = por %p98, %p99
      %p102 = scmp.ne.s32.totalorder %s87, %s101
      %p103 = scmp.eq.s32.totalorder %s21, 0
      %p104 = por %p102, %p103
      %s105 = ssub.s32 %s22, %s34
      %p106 = scmp.eq.s32.totalorder %s105, 0
      %s108 = sadd.s32 %s107, 1
      %s109 = scalar_select %p106, %s107, %s108
      %p112 = pneg %p106
      %p113 = scmp.eq.s32.totalorder %s15, 1
      %p114 = por %p112, %p113
      %p115 = scmp.ne.s32.totalorder %s107, %s110
      %p116 = scmp.eq.s32.totalorder %s15, 0
      %p117 = por %p115, %p116
      %p118 = scmp.ne.s32.totalorder %s107, %s110
      %p119 = scmp.eq.s32.totalorder %s20, 1
      %p120 = por %p118, %p119
      %p121 = scmp.ne.s32.totalorder %s110, %s111
      %p122 = scmp.eq.s32.totalorder %s20, 0
      %p123 = por %p121, %p122
      %p124 = scmp.ne.s32.totalorder %s110, %s111
      %p125 = scmp.eq.s32.totalorder %s21, 1
      %p126 = por %p124, %p125
      %p128 = scmp.ne.s32.totalorder %s111, %s127
      %p129 = scmp.eq.s32.totalorder %s21, 0
      %p130 = por %p128, %p129
      %p131 = scmp.le.s32.totalorder 1, %s15
      %p132 = scmp.lt.s32.totalorder %s15, 3
      %p133 = pnand %p131, %p132
      %p134 = pneg %p133
      // Predicated region
      $region9: #{lora_forward.1} parent=5 // pred_check
        _
      $region10: #{lora_forward.1} parent=5 // pred_check_branch
        %136 = sbr.rel (%p133) target = $region12
      $region11: #{lora_forward.1} parent=5 // pred_region
        %s137 = ssub.s32 %s15, 1
        // Predicated region
        $region13: #{lora_forward.1} parent=11 // pred_check
          %p138 = pneg %p76
        $region14: #{lora_forward.1} parent=11 // pred_check_branch
          %140 = sbr.rel (%p138) target = $region16
        $region15: #{lora_forward.1} parent=11 // pred_region
          _
        $region16: #{lora_forward.1} parent=11 // pred_fallthru
          _
        // Predicated region
        $region17: #{lora_forward.1} parent=11 // pred_check
          %p141 = pneg %p97
        $region18: #{lora_forward.1} parent=11 // pred_check_branch
          %143 = sbr.rel (%p141) target = $region20
        $region19: #{lora_forward.1} parent=11 // pred_region
          _
        $region20: #{lora_forward.1} parent=11 // pred_fallthru
          _
      $region12: #{lora_forward.1} parent=5 // pred_fallthru
        _
      %p144 = scmp.lt.s32.totalorder %s15, 2
      // Predicated region
      $region21: #{lora_forward.1} parent=5 // pred_check
        %p145 = pneg %p144
      $region22: #{lora_forward.1} parent=5 // pred_check_branch
        %147 = sbr.rel (%p145) target = $region24
      $region23: #{lora_forward.1} parent=5 // pred_region
        // Predicated region
        $region25: #{lora_forward.1} parent=23 // pred_check
          %p148 = pneg %p49
        $region26: #{lora_forward.1} parent=23 // pred_check_branch
          %150 = sbr.rel (%p148) target = $region28
        $region27: #{lora_forward.1} parent=23 // pred_region
          %s151 = sand.u32 %s39, 1
          %s152 = scalar_lea.sflag [#allocation4], %s151
          %s153 = sand.u32 %s39, 1
          %s154 = smul.addr %s153, 512
          %s155 = scalar_lea.vmem [#allocation3], %s154
          %s156 = smul.u32 16, %s22
          %s157 = smul.u32 4, %s23
          %159 = vsyncadd %s152, 0
          %s160 = smul.addr %s156, 4
          %s161 = sadd.s32 %s157, %s160
          %s162 = smul.addr %s161, 8
          %s163 = scalar_lea.hbm %s0, %s162
          %s164 = sshll.u32 %s163, 4
          %s165 = int_to_ptr.hbm [resolvable:$true] %s164
          %s166 = sshll.u32 %s155, 4
          %s167 = int_to_ptr.vmem [resolvable:$true] %s166
          %172 = dma.hbm_to_vmem [thread:$0]  %s165, 8192, %s167, %s152, 512, 512, 32
        $region28: #{lora_forward.1} parent=23 // pred_fallthru
          _
      $region24: #{lora_forward.1} parent=5 // pred_fallthru
        _
      %p173 = scmp.le.s32.totalorder 1, %s15
      %p174 = scmp.lt.s32.totalorder %s15, 3
      %p175 = pnand %p173, %p174
      %p176 = pneg %p175
      // Predicated region
      $region29: #{lora_forward.1} parent=5 // pred_check
        _
      $region30: #{lora_forward.1} parent=5 // pred_check_branch
        %178 = sbr.rel (%p175) target = $region32
      $region31: #{lora_forward.1} parent=5 // pred_region
        %s179 = ssub.s32 %s15, 1
        %s180 = sand.u32 %s42, 1
        %s181 = scalar_lea.sflag [#allocation4], %s180
        %s182 = sand.u32 %s42, 1
        %s183 = smul.addr %s182, 512
        %s184 = scalar_lea.vmem [#allocation3], %s183
        // Predicated region
        $region33: #{lora_forward.1} parent=31 // pred_check
          %p185 = pneg %p55
        $region34: #{lora_forward.1} parent=31 // pred_check_branch
          %187 = sbr.rel (%p185) target = $region36
        $region35: #{lora_forward.1} parent=31 // pred_region
          %189 = dma.done %s181, 8192
        $region36: #{lora_forward.1} parent=31 // pred_fallthru
          _
        %s190 = sand.u32 %s42, 1
        %s191 = scalar_lea.sflag [#allocation4], %s190
        %s192 = sand.u32 %s42, 1
        %s193 = smul.addr %s192, 512
        %s194 = scalar_lea.vmem [#allocation3], %s193
        %p195 = pneg %p55
        %p196 = pneg %p52
        %p197 = pneg %p76
        %p198 = pneg %p73
        %p199 = pneg %p97
        %p200 = pneg %p94
        %p201 = pneg %p123
        %p202 = pneg %p120
        %s203 = sand.u32 %s110, 1
        %s204 = scalar_lea.sflag [#allocation5], %s203
        %s205 = sand.u32 %s110, 1
        %s206 = smul.addr %s205, 256
        %s207 = scalar_lea.vmem [#allocation6], %s206
        %s208 = smul.u32 16, %s24
        %s209 = smul.u32 4, %s25
        %s210 = smul.u32 16, %s24
        %p211 = scmp.eq.s32.totalorder %s25, 0
        // Predicated region
        $region37: #{lora_forward.1} parent=31 // pred_check
          %p212 = pneg %p211
        $region38: #{lora_forward.1} parent=31 // pred_check_branch
          %214 = sbr.rel (%p212) target = $region40
        $region39: #{lora_forward.1} parent=31 // pred_region
          %215 = vst [vmem:[#allocation2] sm:$0xff] 0.0
          %216 = vst [vmem:[#allocation2 + $0x8] sm:$0xff] 0.0
          %217 = vst [vmem:[#allocation2 + $0x10] sm:$0xff] 0.0
          %218 = vst [vmem:[#allocation2 + $0x18] sm:$0xff] 0.0
          %219 = vst [vmem:[#allocation2 + $0x20] sm:$0xff] 0.0
          %220 = vst [vmem:[#allocation2 + $0x28] sm:$0xff] 0.0
          %221 = vst [vmem:[#allocation2 + $0x30] sm:$0xff] 0.0
          %222 = vst [vmem:[#allocation2 + $0x38] sm:$0xff] 0.0
          %223 = vst [vmem:[#allocation2 + $0x40] sm:$0xff] 0.0
          %224 = vst [vmem:[#allocation2 + $0x48] sm:$0xff] 0.0
          %225 = vst [vmem:[#allocation2 + $0x50] sm:$0xff] 0.0
          %226 = vst [vmem:[#allocation2 + $0x58] sm:$0xff] 0.0
          %227 = vst [vmem:[#allocation2 + $0x60] sm:$0xff] 0.0
          %228 = vst [vmem:[#allocation2 + $0x68] sm:$0xff] 0.0
          %229 = vst [vmem:[#allocation2 + $0x70] sm:$0xff] 0.0
          %230 = vst [vmem:[#allocation2 + $0x78] sm:$0xff] 0.0
        $region40: #{lora_forward.1} parent=31 // pred_fallthru
          _
        %v231 = vld [vmem:[%s184] sm:$0xff]
        %v232 = vld [vmem:[%s184 + $0x8] sm:$0xff]
        %v233 = vld [vmem:[%s184 + $0x10] sm:$0xff]
        %v234 = vld [vmem:[%s184 + $0x18] sm:$0xff]
        %v235 = vld [vmem:[%s184 + $0x20] sm:$0xff]
        %v236 = vld [vmem:[%s184 + $0x28] sm:$0xff]
        %v237 = vld [vmem:[%s184 + $0x30] sm:$0xff]
        %v238 = vld [vmem:[%s184 + $0x38] sm:$0xff]
        %v239 = vld [vmem:[%s184 + $0x40] sm:$0xff]
        %v240 = vld [vmem:[%s184 + $0x48] sm:$0xff]
        %v241 = vld [vmem:[%s184 + $0x50] sm:$0xff]
        %v242 = vld [vmem:[%s184 + $0x58] sm:$0xff]
        %v243 = vld [vmem:[%s184 + $0x60] sm:$0xff]
        %v244 = vld [vmem:[%s184 + $0x68] sm:$0xff]
        %v245 = vld [vmem:[%s184 + $0x70] sm:$0xff]
        %v246 = vld [vmem:[%s184 + $0x78] sm:$0xff]
        %v247 = vld [vmem:[%s184 + $0x80] sm:$0xff]
        %v248 = vld [vmem:[%s184 + $0x88] sm:$0xff]
        %v249 = vld [vmem:[%s184 + $0x90] sm:$0xff]
        %v250 = vld [vmem:[%s184 + $0x98] sm:$0xff]
        %v251 = vld [vmem:[%s184 + $0xa0] sm:$0xff]
        %v252 = vld [vmem:[%s184 + $0xa8] sm:$0xff]
        %v253 = vld [vmem:[%s184 + $0xb0] sm:$0xff]
        %v254 = vld [vmem:[%s184 + $0xb8] sm:$0xff]
        %v255 = vld [vmem:[%s184 + $0xc0] sm:$0xff]
        %v256 = vld [vmem:[%s184 + $0xc8] sm:$0xff]
        %v257 = vld [vmem:[%s184 + $0xd0] sm:$0xff]
        %v258 = vld [vmem:[%s184 + $0xd8] sm:$0xff]
        %v259 = vld [vmem:[%s184 + $0xe0] sm:$0xff]
        %v260 = vld [vmem:[%s184 + $0xe8] sm:$0xff]
        %v261 = vld [vmem:[%s184 + $0xf0] sm:$0xff]
        %v262 = vld [vmem:[%s184 + $0xf8] sm:$0xff]
        %v263 = vld [vmem:[%s184 + $0x100] sm:$0xff]
        %v264 = vld [vmem:[%s184 + $0x108] sm:$0xff]
        %v265 = vld [vmem:[%s184 + $0x110] sm:$0xff]
        %v266 = vld [vmem:[%s184 + $0x118] sm:$0xff]
        %v267 = vld [vmem:[%s184 + $0x120] sm:$0xff]
        %v268 = vld [vmem:[%s184 + $0x128] sm:$0xff]
        %v269 = vld [vmem:[%s184 + $0x130] sm:$0xff]
        %v270 = vld [vmem:[%s184 + $0x138] sm:$0xff]
        %v271 = vld [vmem:[%s184 + $0x140] sm:$0xff]
        %v272 = vld [vmem:[%s184 + $0x148] sm:$0xff]
        %v273 = vld [vmem:[%s184 + $0x150] sm:$0xff]
        %v274 = vld [vmem:[%s184 + $0x158] sm:$0xff]
        %v275 = vld [vmem:[%s184 + $0x160] sm:$0xff]
        %v276 = vld [vmem:[%s184 + $0x168] sm:$0xff]
        %v277 = vld [vmem:[%s184 + $0x170] sm:$0xff]
        %v278 = vld [vmem:[%s184 + $0x178] sm:$0xff]
        %v279 = vld [vmem:[%s184 + $0x180] sm:$0xff]
        %v280 = vld [vmem:[%s184 + $0x188] sm:$0xff]
        %v281 = vld [vmem:[%s184 + $0x190] sm:$0xff]
        %v282 = vld [vmem:[%s184 + $0x198] sm:$0xff]
        %v283 = vld [vmem:[%s184 + $0x1a0] sm:$0xff]
        %v284 = vld [vmem:[%s184 + $0x1a8] sm:$0xff]
        %v285 = vld [vmem:[%s184 + $0x1b0] sm:$0xff]
        %v286 = vld [vmem:[%s184 + $0x1b8] sm:$0xff]
        %v287 = vld [vmem:[%s184 + $0x1c0] sm:$0xff]
        %v288 = vld [vmem:[%s184 + $0x1c8] sm:$0xff]
        %v289 = vld [vmem:[%s184 + $0x1d0] sm:$0xff]
        %v290 = vld [vmem:[%s184 + $0x1d8] sm:$0xff]
        %v291 = vld [vmem:[%s184 + $0x1e0] sm:$0xff]
        %v292 = vld [vmem:[%s184 + $0x1e8] sm:$0xff]
        %v293 = vld [vmem:[%s184 + $0x1f0] sm:$0xff]
        %v294 = vld [vmem:[%s184 + $0x1f8] sm:$0xff]
        %v295 = vpack.c.bf16 %v235, %v231
        %v296 = vpack.c.bf16 %v236, %v232
        %v297 = vpack.c.bf16 %v237, %v233
        %v298 = vpack.c.bf16 %v238, %v234
        %v299 = vpack.c.bf16 %v243, %v239
        %v300 = vpack.c.bf16 %v244, %v240
        %v301 = vpack.c.bf16 %v245, %v241
        %v302 = vpack.c.bf16 %v246, %v242
        %v303 = vpack.c.bf16 %v251, %v247
        %v304 = vpack.c.bf16 %v252, %v248
        %v305 = vpack.c.bf16 %v253, %v249
        %v306 = vpack.c.bf16 %v254, %v250
        %v307 = vpack.c.bf16 %v259, %v255
        %v308 = vpack.c.bf16 %v260, %v256
        %v309 = vpack.c.bf16 %v261, %v257
        %v310 = vpack.c.bf16 %v262, %v258
        %v311 = vpack.c.bf16 %v267, %v263
        %v312 = vpack.c.bf16 %v268, %v264
        %v313 = vpack.c.bf16 %v269, %v265
        %v314 = vpack.c.bf16 %v270, %v266
        %v315 = vpack.c.bf16 %v275, %v271
        %v316 = vpack.c.bf16 %v276, %v272
        %v317 = vpack.c.bf16 %v277, %v273
        %v318 = vpack.c.bf16 %v278, %v274
        %v319 = vpack.c.bf16 %v283, %v279
        %v320 = vpack.c.bf16 %v284, %v280
        %v321 = vpack.c.bf16 %v285, %v281
        %v322 = vpack.c.bf16 %v286, %v282
        %v323 = vpack.c.bf16 %v291, %v287
        %v324 = vpack.c.bf16 %v292, %v288
        %v325 = vpack.c.bf16 %v293, %v289
        %v326 = vpack.c.bf16 %v294, %v290
        %s327 = smul.u32 %s25, 512
        %s328 = sshra.s32 %s327, 3
        %s329 = sand.u32 %s327, 7
        %s330 = smul.addr %s328, 4
        %s331 = scalar_lea.vmem %s1, %s330
        %v332 = vld [vmem:[%s331] sm:$0xf]
        %v333 = vld [vmem:[%s331 + $0x4] sm:$0xf]
        %v334 = vld [vmem:[%s331 + $0x8] sm:$0xf]
        %v335 = vld [vmem:[%s331 + $0xc] sm:$0xf]
        %v336 = vld [vmem:[%s331 + $0x10] sm:$0xf]
        %v337 = vld [vmem:[%s331 + $0x14] sm:$0xf]
        %v338 = vld [vmem:[%s331 + $0x18] sm:$0xf]
        %v339 = vld [vmem:[%s331 + $0x1c] sm:$0xf]
        %v340 = vld [vmem:[%s331 + $0x20] sm:$0xf]
        %v341 = vld [vmem:[%s331 + $0x24] sm:$0xf]
        %v342 = vld [vmem:[%s331 + $0x28] sm:$0xf]
        %v343 = vld [vmem:[%s331 + $0x2c] sm:$0xf]
        %v344 = vld [vmem:[%s331 + $0x30] sm:$0xf]
        %v345 = vld [vmem:[%s331 + $0x34] sm:$0xf]
        %v346 = vld [vmem:[%s331 + $0x38] sm:$0xf]
        %v347 = vld [vmem:[%s331 + $0x3c] sm:$0xf]
        %v348 = vld [vmem:[%s331 + $0x40] sm:$0xf]
        %v349 = vld [vmem:[%s331 + $0x44] sm:$0xf]
        %v350 = vld [vmem:[%s331 + $0x48] sm:$0xf]
        %v351 = vld [vmem:[%s331 + $0x4c] sm:$0xf]
        %v352 = vld [vmem:[%s331 + $0x50] sm:$0xf]
        %v353 = vld [vmem:[%s331 + $0x54] sm:$0xf]
        %v354 = vld [vmem:[%s331 + $0x58] sm:$0xf]
        %v355 = vld [vmem:[%s331 + $0x5c] sm:$0xf]
        %v356 = vld [vmem:[%s331 + $0x60] sm:$0xf]
        %v357 = vld [vmem:[%s331 + $0x64] sm:$0xf]
        %v358 = vld [vmem:[%s331 + $0x68] sm:$0xf]
        %v359 = vld [vmem:[%s331 + $0x6c] sm:$0xf]
        %v360 = vld [vmem:[%s331 + $0x70] sm:$0xf]
        %v361 = vld [vmem:[%s331 + $0x74] sm:$0xf]
        %v362 = vld [vmem:[%s331 + $0x78] sm:$0xf]
        %v363 = vld [vmem:[%s331 + $0x7c] sm:$0xf]
        %v364 = vld [vmem:[%s331 + $0x80] sm:$0xf]
        %v365 = vld [vmem:[%s331 + $0x84] sm:$0xf]
        %v366 = vld [vmem:[%s331 + $0x88] sm:$0xf]
        %v367 = vld [vmem:[%s331 + $0x8c] sm:$0xf]
        %v368 = vld [vmem:[%s331 + $0x90] sm:$0xf]
        %v369 = vld [vmem:[%s331 + $0x94] sm:$0xf]
        %v370 = vld [vmem:[%s331 + $0x98] sm:$0xf]
        %v371 = vld [vmem:[%s331 + $0x9c] sm:$0xf]
        %v372 = vld [vmem:[%s331 + $0xa0] sm:$0xf]
        %v373 = vld [vmem:[%s331 + $0xa4] sm:$0xf]
        %v374 = vld [vmem:[%s331 + $0xa8] sm:$0xf]
        %v375 = vld [vmem:[%s331 + $0xac] sm:$0xf]
        %v376 = vld [vmem:[%s331 + $0xb0] sm:$0xf]
        %v377 = vld [vmem:[%s331 + $0xb4] sm:$0xf]
        %v378 = vld [vmem:[%s331 + $0xb8] sm:$0xf]
        %v379 = vld [vmem:[%s331 + $0xbc] sm:$0xf]
        %v380 = vld [vmem:[%s331 + $0xc0] sm:$0xf]
        %v381 = vld [vmem:[%s331 + $0xc4] sm:$0xf]
        %v382 = vld [vmem:[%s331 + $0xc8] sm:$0xf]
        %v383 = vld [vmem:[%s331 + $0xcc] sm:$0xf]
        %v384 = vld [vmem:[%s331 + $0xd0] sm:$0xf]
        %v385 = vld [vmem:[%s331 + $0xd4] sm:$0xf]
        %v386 = vld [vmem:[%s331 + $0xd8] sm:$0xf]
        %v387 = vld [vmem:[%s331 + $0xdc] sm:$0xf]
        %v388 = vld [vmem:[%s331 + $0xe0] sm:$0xf]
        %v389 = vld [vmem:[%s331 + $0xe4] sm:$0xf]
        %v390 = vld [vmem:[%s331 + $0xe8] sm:$0xf]
        %v391 = vld [vmem:[%s331 + $0xec] sm:$0xf]
        %v392 = vld [vmem:[%s331 + $0xf0] sm:$0xf]
        %v393 = vld [vmem:[%s331 + $0xf4] sm:$0xf]
        %v394 = vld [vmem:[%s331 + $0xf8] sm:$0xf]
        %v395 = vld [vmem:[%s331 + $0xfc] sm:$0xf]
        %v396 = vld [vmem:[#allocation2] sm:$0xff]
        %v397 = vld [vmem:[#allocation2 + $0x8] sm:$0xff]
        %v398 = vld [vmem:[#allocation2 + $0x10] sm:$0xff]
        %v399 = vld [vmem:[#allocation2 + $0x18] sm:$0xff]
        %v400 = vld [vmem:[#allocation2 + $0x20] sm:$0xff]
        %v401 = vld [vmem:[#allocation2 + $0x28] sm:$0xff]
        %v402 = vld [vmem:[#allocation2 + $0x30] sm:$0xff]
        %v403 = vld [vmem:[#allocation2 + $0x38] sm:$0xff]
        %v404 = vld [vmem:[#allocation2 + $0x40] sm:$0xff]
        %v405 = vld [vmem:[#allocation2 + $0x48] sm:$0xff]
        %v406 = vld [vmem:[#allocation2 + $0x50] sm:$0xff]
        %v407 = vld [vmem:[#allocation2 + $0x58] sm:$0xff]
        %v408 = vld [vmem:[#allocation2 + $0x60] sm:$0xff]
        %v409 = vld [vmem:[#allocation2 + $0x68] sm:$0xff]
        %v410 = vld [vmem:[#allocation2 + $0x70] sm:$0xff]
        %v411 = vld [vmem:[#allocation2 + $0x78] sm:$0xff]
        %v476 = vunpack.c.l.b16 %v332
        %v477 = vunpack.c.l.b16 %v333
        %v478 = vunpack.c.l.b16 %v334
        %v479 = vunpack.c.l.b16 %v335
        %v480 = vunpack.c.l.b16 %v336
        %v481 = vunpack.c.l.b16 %v337
        %v482 = vunpack.c.l.b16 %v338
        %v483 = vunpack.c.l.b16 %v339
        %v484 = vunpack.c.l.b16 %v340
        %v485 = vunpack.c.l.b16 %v341
        %v486 = vunpack.c.l.b16 %v342
        %v487 = vunpack.c.l.b16 %v343
        %v488 = vunpack.c.l.b16 %v344
        %v489 = vunpack.c.l.b16 %v345
        %v490 = vunpack.c.l.b16 %v346
        %v491 = vunpack.c.l.b16 %v347
        %v492 = vunpack.c.l.b16 %v348
        %v493 = vunpack.c.l.b16 %v349
        %v494 = vunpack.c.l.b16 %v350
        %v495 = vunpack.c.l.b16 %v351
        %v496 = vunpack.c.l.b16 %v352
        %v497 = vunpack.c.l.b16 %v353
        %v498 = vunpack.c.l.b16 %v354
        %v499 = vunpack.c.l.b16 %v355
        %v500 = vunpack.c.l.b16 %v356
        %v501 = vunpack.c.l.b16 %v357
        %v502 = vunpack.c.l.b16 %v358
        %v503 = vunpack.c.l.b16 %v359
        %v504 = vunpack.c.l.b16 %v360
        %v505 = vunpack.c.l.b16 %v361
        %v506 = vunpack.c.l.b16 %v362
        %v507 = vunpack.c.l.b16 %v363
        %v508 = vunpack.c.l.b16 %v364
        %v509 = vunpack.c.l.b16 %v365
        %v510 = vunpack.c.l.b16 %v366
        %v511 = vunpack.c.l.b16 %v367
        %v512 = vunpack.c.l.b16 %v368
        %v513 = vunpack.c.l.b16 %v369
        %v514 = vunpack.c.l.b16 %v370
        %v515 = vunpack.c.l.b16 %v371
        %v516 = vunpack.c.l.b16 %v372
        %v517 = vunpack.c.l.b16 %v373
        %v518 = vunpack.c.l.b16 %v374
        %v519 = vunpack.c.l.b16 %v375
        %v520 = vunpack.c.l.b16 %v376
        %v521 = vunpack.c.l.b16 %v377
        %v522 = vunpack.c.l.b16 %v378
        %v523 = vunpack.c.l.b16 %v379
        %v524 = vunpack.c.l.b16 %v380
        %v525 = vunpack.c.l.b16 %v381
        %v526 = vunpack.c.l.b16 %v382
        %v527 = vunpack.c.l.b16 %v383
        %v528 = vunpack.c.l.b16 %v384
        %v529 = vunpack.c.l.b16 %v385
        %v530 = vunpack.c.l.b16 %v386
        %v531 = vunpack.c.l.b16 %v387
        %v532 = vunpack.c.l.b16 %v388
        %v533 = vunpack.c.l.b16 %v389
        %v534 = vunpack.c.l.b16 %v390
        %v535 = vunpack.c.l.b16 %v391
        %v536 = vunpack.c.l.b16 %v392
        %v537 = vunpack.c.l.b16 %v393
        %v538 = vunpack.c.l.b16 %v394
        %v539 = vunpack.c.l.b16 %v395
        %v540 = vpack.c.b16 %v477, %v476
        %v541 = vpack.c.b16 %v479, %v478
        %v542 = vpack.c.b16 %v481, %v480
        %v543 = vpack.c.b16 %v483, %v482
        %v544 = vpack.c.b16 %v485, %v484
        %v545 = vpack.c.b16 %v487, %v486
        %v546 = vpack.c.b16 %v489, %v488
        %v547 = vpack.c.b16 %v491, %v490
        %v548 = vpack.c.b16 %v493, %v492
        %v549 = vpack.c.b16 %v495, %v494
        %v550 = vpack.c.b16 %v497, %v496
        %v551 = vpack.c.b16 %v499, %v498
        %v552 = vpack.c.b16 %v501, %v500
        %v553 = vpack.c.b16 %v503, %v502
        %v554 = vpack.c.b16 %v505, %v504
        %v555 = vpack.c.b16 %v507, %v506
        %v556 = vpack.c.b16 %v509, %v508
        %v557 = vpack.c.b16 %v511, %v510
        %v558 = vpack.c.b16 %v513, %v512
        %v559 = vpack.c.b16 %v515, %v514
        %v560 = vpack.c.b16 %v517, %v516
        %v561 = vpack.c.b16 %v519, %v518
        %v562 = vpack.c.b16 %v521, %v520
        %v563 = vpack.c.b16 %v523, %v522
        %v564 = vpack.c.b16 %v525, %v524
        %v565 = vpack.c.b16 %v527, %v526
        %v566 = vpack.c.b16 %v529, %v528
        %v567 = vpack.c.b16 %v531, %v530
        %v568 = vpack.c.b16 %v533, %v532
        %v569 = vpack.c.b16 %v535, %v534
        %v570 = vpack.c.b16 %v537, %v536
        %v571 = vpack.c.b16 %v539, %v538
        %604 = vmatpush.bf16.msra.mxu0 %v547
        %605 = vmatpush.bf16.msra.mxu0 %v546
        %606 = vmatpush.bf16.msra.mxu0 %v545
        %607 = vmatpush.bf16.msra.mxu0 %v544
        %608 = vmatpush.bf16.msra.mxu0 %v543
        %609 = vmatpush.bf16.msra.mxu0 %v542
        %610 = vmatpush.bf16.msra.mxu0 %v541
        %611 = vmatpush.bf16.msra.mxu0 %v540
        %612 = vmatmul.bf16.gmra.mxu0 %v295
        %v613 = vpop.f32.mrf.mxu0
        %v614 = vadd.f32 0.0, %v613
        %v615 = vpop.f32.mrf.mxu0
        %v616 = vadd.f32 0.0, %v615
        %617 = vmatmul.bf16.gmra.mxu0 %v299
        %v618 = vpop.f32.mrf.mxu0
        %v619 = vadd.f32 0.0, %v618
        %v620 = vpop.f32.mrf.mxu0
        %v621 = vadd.f32 0.0, %v620
        %622 = vmatmul.bf16.gmra.mxu0 %v303
        %v623 = vpop.f32.mrf.mxu0
        %v624 = vadd.f32 0.0, %v623
        %v625 = vpop.f32.mrf.mxu0
        %v626 = vadd.f32 0.0, %v625
        %627 = vmatmul.bf16.gmra.mxu0 %v307
        %v628 = vpop.f32.mrf.mxu0
        %v629 = vadd.f32 0.0, %v628
        %v630 = vpop.f32.mrf.mxu0
        %v631 = vadd.f32 0.0, %v630
        %632 = vmatmul.bf16.gmra.mxu0 %v311
        %v633 = vpop.f32.mrf.mxu0
        %v634 = vadd.f32 0.0, %v633
        %v635 = vpop.f32.mrf.mxu0
        %v636 = vadd.f32 0.0, %v635
        %637 = vmatmul.bf16.gmra.mxu0 %v315
        %v638 = vpop.f32.mrf.mxu0
        %v639 = vadd.f32 0.0, %v638
        %v640 = vpop.f32.mrf.mxu0
        %v641 = vadd.f32 0.0, %v640
        %642 = vmatmul.bf16.gmra.mxu0 %v319
        %v643 = vpop.f32.mrf.mxu0
        %v644 = vadd.f32 0.0, %v643
        %v645 = vpop.f32.mrf.mxu0
        %v646 = vadd.f32 0.0, %v645
        %647 = vmatmul.bf16.gmra.mxu0 %v323
        %v648 = vpop.f32.mrf.mxu0
        %v649 = vadd.f32 0.0, %v648
        %v650 = vpop.f32.mrf.mxu0
        %v651 = vadd.f32 0.0, %v650
        %652 = vdwg.mxu0
        %653 = vmatpush.bf16.msra.mxu0 %v555
        %654 = vmatpush.bf16.msra.mxu0 %v554
        %655 = vmatpush.bf16.msra.mxu0 %v553
        %656 = vmatpush.bf16.msra.mxu0 %v552
        %657 = vmatpush.bf16.msra.mxu0 %v551
        %658 = vmatpush.bf16.msra.mxu0 %v550
        %659 = vmatpush.bf16.msra.mxu0 %v549
        %660 = vmatpush.bf16.msra.mxu0 %v548
        %661 = vmatmul.bf16.gmra.mxu0 %v296
        %v662 = vpop.f32.mrf.mxu0
        %v663 = vadd.f32 %v614, %v662
        %v664 = vpop.f32.mrf.mxu0
        %v665 = vadd.f32 %v616, %v664
        %666 = vmatmul.bf16.gmra.mxu0 %v300
        %v667 = vpop.f32.mrf.mxu0
        %v668 = vadd.f32 %v619, %v667
        %v669 = vpop.f32.mrf.mxu0
        %v670 = vadd.f32 %v621, %v669
        %671 = vmatmul.bf16.gmra.mxu0 %v304
        %v672 = vpop.f32.mrf.mxu0
        %v673 = vadd.f32 %v624, %v672
        %v674 = vpop.f32.mrf.mxu0
        %v675 = vadd.f32 %v626, %v674
        %676 = vmatmul.bf16.gmra.mxu0 %v308
        %v677 = vpop.f32.mrf.mxu0
        %v678 = vadd.f32 %v629, %v677
        %v679 = vpop.f32.mrf.mxu0
        %v680 = vadd.f32 %v631, %v679
        %681 = vmatmul.bf16.gmra.mxu0 %v312
        %v682 = vpop.f32.mrf.mxu0
        %v683 = vadd.f32 %v634, %v682
        %v684 = vpop.f32.mrf.mxu0
        %v685 = vadd.f32 %v636, %v684
        %686 = vmatmul.bf16.gmra.mxu0 %v316
        %v687 = vpop.f32.mrf.mxu0
        %v688 = vadd.f32 %v639, %v687
        %v689 = vpop.f32.mrf.mxu0
        %v690 = vadd.f32 %v641, %v689
        %691 = vmatmul.bf16.gmra.mxu0 %v320
        %v692 = vpop.f32.mrf.mxu0
        %v693 = vadd.f32 %v644, %v692
        %v694 = vpop.f32.mrf.mxu0
        %v695 = vadd.f32 %v646, %v694
        %696 = vmatmul.bf16.gmra.mxu0 %v324
        %v697 = vpop.f32.mrf.mxu0
        %v698 = vadd.f32 %v649, %v697
        %v699 = vpop.f32.mrf.mxu0
        %v700 = vadd.f32 %v651, %v699
        %701 = vdwg.mxu0
        %702 = vmatpush.bf16.msra.mxu0 %v563
        %703 = vmatpush.bf16.msra.mxu0 %v562
        %704 = vmatpush.bf16.msra.mxu0 %v561
        %705 = vmatpush.bf16.msra.mxu0 %v560
        %706 = vmatpush.bf16.msra.mxu0 %v559
        %707 = vmatpush.bf16.msra.mxu0 %v558
        %708 = vmatpush.bf16.msra.mxu0 %v557
        %709 = vmatpush.bf16.msra.mxu0 %v556
        %710 = vmatmul.bf16.gmra.mxu0 %v297
        %v711 = vpop.f32.mrf.mxu0
        %v712 = vadd.f32 %v663, %v711
        %v713 = vpop.f32.mrf.mxu0
        %v714 = vadd.f32 %v665, %v713
        %715 = vmatmul.bf16.gmra.mxu0 %v301
        %v716 = vpop.f32.mrf.mxu0
        %v717 = vadd.f32 %v668, %v716
        %v718 = vpop.f32.mrf.mxu0
        %v719 = vadd.f32 %v670, %v718
        %720 = vmatmul.bf16.gmra.mxu0 %v305
        %v721 = vpop.f32.mrf.mxu0
        %v722 = vadd.f32 %v673, %v721
        %v723 = vpop.f32.mrf.mxu0
        %v724 = vadd.f32 %v675, %v723
        %725 = vmatmul.bf16.gmra.mxu0 %v309
        %v726 = vpop.f32.mrf.mxu0
        %v727 = vadd.f32 %v678, %v726
        %v728 = vpop.f32.mrf.mxu0
        %v729 = vadd.f32 %v680, %v728
        %730 = vmatmul.bf16.gmra.mxu0 %v313
        %v731 = vpop.f32.mrf.mxu0
        %v732 = vadd.f32 %v683, %v731
        %v733 = vpop.f32.mrf.mxu0
        %v734 = vadd.f32 %v685, %v733
        %735 = vmatmul.bf16.gmra.mxu0 %v317
        %v736 = vpop.f32.mrf.mxu0
        %v737 = vadd.f32 %v688, %v736
        %v738 = vpop.f32.mrf.mxu0
        %v739 = vadd.f32 %v690, %v738
        %740 = vmatmul.bf16.gmra.mxu0 %v321
        %v741 = vpop.f32.mrf.mxu0
        %v742 = vadd.f32 %v693, %v741
        %v743 = vpop.f32.mrf.mxu0
        %v744 = vadd.f32 %v695, %v743
        %745 = vmatmul.bf16.gmra.mxu0 %v325
        %v746 = vpop.f32.mrf.mxu0
        %v747 = vadd.f32 %v698, %v746
        %v748 = vpop.f32.mrf.mxu0
        %v749 = vadd.f32 %v700, %v748
        %750 = vdwg.mxu0
        %751 = vmatpush.bf16.msra.mxu0 %v571
        %752 = vmatpush.bf16.msra.mxu0 %v570
        %753 = vmatpush.bf16.msra.mxu0 %v569
        %754 = vmatpush.bf16.msra.mxu0 %v568
        %755 = vmatpush.bf16.msra.mxu0 %v567
        %756 = vmatpush.bf16.msra.mxu0 %v566
        %757 = vmatpush.bf16.msra.mxu0 %v565
        %758 = vmatpush.bf16.msra.mxu0 %v564
        %759 = vmatmul.bf16.gmra.mxu0 %v298
        %v760 = vpop.f32.mrf.mxu0
        %v761 = vadd.f32 %v712, %v760
        %v762 = vpop.f32.mrf.mxu0
        %v763 = vadd.f32 %v714, %v762
        %764 = vmatmul.bf16.gmra.mxu0 %v302
        %v765 = vpop.f32.mrf.mxu0
        %v766 = vadd.f32 %v717, %v765
        %v767 = vpop.f32.mrf.mxu0
        %v768 = vadd.f32 %v719, %v767
        %769 = vmatmul.bf16.gmra.mxu0 %v306
        %v770 = vpop.f32.mrf.mxu0
        %v771 = vadd.f32 %v722, %v770
        %v772 = vpop.f32.mrf.mxu0
        %v773 = vadd.f32 %v724, %v772
        %774 = vmatmul.bf16.gmra.mxu0 %v310
        %v775 = vpop.f32.mrf.mxu0
        %v776 = vadd.f32 %v727, %v775
        %v777 = vpop.f32.mrf.mxu0
        %v778 = vadd.f32 %v729, %v777
        %779 = vmatmul.bf16.gmra.mxu0 %v314
        %v780 = vpop.f32.mrf.mxu0
        %v781 = vadd.f32 %v732, %v780
        %v782 = vpop.f32.mrf.mxu0
        %v783 = vadd.f32 %v734, %v782
        %784 = vmatmul.bf16.gmra.mxu0 %v318
        %v785 = vpop.f32.mrf.mxu0
        %v786 = vadd.f32 %v737, %v785
        %v787 = vpop.f32.mrf.mxu0
        %v788 = vadd.f32 %v739, %v787
        %789 = vmatmul.bf16.gmra.mxu0 %v322
        %v790 = vpop.f32.mrf.mxu0
        %v791 = vadd.f32 %v742, %v790
        %v792 = vpop.f32.mrf.mxu0
        %v793 = vadd.f32 %v744, %v792
        %794 = vmatmul.bf16.gmra.mxu0 %v326
        %v795 = vpop.f32.mrf.mxu0
        %v796 = vadd.f32 %v747, %v795
        %v797 = vpop.f32.mrf.mxu0
        %v798 = vadd.f32 %v749, %v797
        %799 = vdwg.mxu0
        %v800 = vadd.f32 %v396, %v761
        %v801 = vadd.f32 %v397, %v763
        %v802 = vadd.f32 %v398, %v766
        %v803 = vadd.f32 %v399, %v768
        %v804 = vadd.f32 %v400, %v771
        %v805 = vadd.f32 %v401, %v773
        %v806 = vadd.f32 %v402, %v776
        %v807 = vadd.f32 %v403, %v778
        %v808 = vadd.f32 %v404, %v781
        %v809 = vadd.f32 %v405, %v783
        %v810 = vadd.f32 %v406, %v786
        %v811 = vadd.f32 %v407, %v788
        %v812 = vadd.f32 %v408, %v791
        %v813 = vadd.f32 %v409, %v793
        %v814 = vadd.f32 %v410, %v796
        %v815 = vadd.f32 %v411, %v798
        %816 = vst [vmem:[#allocation2] sm:$0xff] %v800
        %817 = vst [vmem:[#allocation2 + $0x8] sm:$0xff] %v801
        %818 = vst [vmem:[#allocation2 + $0x10] sm:$0xff] %v802
        %819 = vst [vmem:[#allocation2 + $0x18] sm:$0xff] %v803
        %820 = vst [vmem:[#allocation2 + $0x20] sm:$0xff] %v804
        %821 = vst [vmem:[#allocation2 + $0x28] sm:$0xff] %v805
        %822 = vst [vmem:[#allocation2 + $0x30] sm:$0xff] %v806
        %823 = vst [vmem:[#allocation2 + $0x38] sm:$0xff] %v807
        %824 = vst [vmem:[#allocation2 + $0x40] sm:$0xff] %v808
        %825 = vst [vmem:[#allocation2 + $0x48] sm:$0xff] %v809
        %826 = vst [vmem:[#allocation2 + $0x50] sm:$0xff] %v810
        %827 = vst [vmem:[#allocation2 + $0x58] sm:$0xff] %v811
        %828 = vst [vmem:[#allocation2 + $0x60] sm:$0xff] %v812
        %829 = vst [vmem:[#allocation2 + $0x68] sm:$0xff] %v813
        %830 = vst [vmem:[#allocation2 + $0x70] sm:$0xff] %v814
        %831 = vst [vmem:[#allocation2 + $0x78] sm:$0xff] %v815
        // Predicated region
        $region41: #{lora_forward.1} parent=31 // pred_check
          %p832 = pneg %p211
        $region42: #{lora_forward.1} parent=31 // pred_check_branch
          %834 = sbr.rel (%p832) target = $region44
        $region43: #{lora_forward.1} parent=31 // pred_region
          %v835 = vld [vmem:[#allocation2] sm:$0xff]
          %v836 = vld [vmem:[#allocation2 + $0x8] sm:$0xff]
          %v837 = vld [vmem:[#allocation2 + $0x10] sm:$0xff]
          %v838 = vld [vmem:[#allocation2 + $0x18] sm:$0xff]
          %v839 = vld [vmem:[#allocation2 + $0x20] sm:$0xff]
          %v840 = vld [vmem:[#allocation2 + $0x28] sm:$0xff]
          %v841 = vld [vmem:[#allocation2 + $0x30] sm:$0xff]
          %v842 = vld [vmem:[#allocation2 + $0x38] sm:$0xff]
          %v843 = vld [vmem:[#allocation2 + $0x40] sm:$0xff]
          %v844 = vld [vmem:[#allocation2 + $0x48] sm:$0xff]
          %v845 = vld [vmem:[#allocation2 + $0x50] sm:$0xff]
          %v846 = vld [vmem:[#allocation2 + $0x58] sm:$0xff]
          %v847 = vld [vmem:[#allocation2 + $0x60] sm:$0xff]
          %v848 = vld [vmem:[#allocation2 + $0x68] sm:$0xff]
          %v849 = vld [vmem:[#allocation2 + $0x70] sm:$0xff]
          %v850 = vld [vmem:[#allocation2 + $0x78] sm:$0xff]
          %v851 = vmul.f32 %v835, 2.0
          %v852 = vmul.f32 %v836, 2.0
          %v853 = vmul.f32 %v837, 2.0
          %v854 = vmul.f32 %v838, 2.0
          %v855 = vmul.f32 %v839, 2.0
          %v856 = vmul.f32 %v840, 2.0
          %v857 = vmul.f32 %v841, 2.0
          %v858 = vmul.f32 %v842, 2.0
          %v859 = vmul.f32 %v843, 2.0
          %v860 = vmul.f32 %v844, 2.0
          %v861 = vmul.f32 %v845, 2.0
          %v862 = vmul.f32 %v846, 2.0
          %v863 = vmul.f32 %v847, 2.0
          %v864 = vmul.f32 %v848, 2.0
          %v865 = vmul.f32 %v849, 2.0
          %v866 = vmul.f32 %v850, 2.0
          %v867 = vpack.c.bf16 %v852, %v851
          %v868 = vpack.c.bf16 %v854, %v853
          %v869 = vpack.c.bf16 %v856, %v855
          %v870 = vpack.c.bf16 %v858, %v857
          %v871 = vpack.c.bf16 %v860, %v859
          %v872 = vpack.c.bf16 %v862, %v861
          %v873 = vpack.c.bf16 %v864, %v863
          %v874 = vpack.c.bf16 %v866, %v865
          %v875 = vld [vmem:[%s2] sm:$0xff]
          %v876 = vld [vmem:[%s2 + $0x8] sm:$0xff]
          %v877 = vld [vmem:[%s2 + $0x10] sm:$0xff]
          %v878 = vld [vmem:[%s2 + $0x18] sm:$0xff]
          %v879 = vld [vmem:[%s2 + $0x20] sm:$0xff]
          %v880 = vld [vmem:[%s2 + $0x28] sm:$0xff]
          %v881 = vld [vmem:[%s2 + $0x30] sm:$0xff]
          %v882 = vld [vmem:[%s2 + $0x38] sm:$0xff]
          %v883 = vld [vmem:[%s2 + $0x40] sm:$0xff]
          %v884 = vld [vmem:[%s2 + $0x48] sm:$0xff]
          %v885 = vld [vmem:[%s2 + $0x50] sm:$0xff]
          %v886 = vld [vmem:[%s2 + $0x58] sm:$0xff]
          %v887 = vld [vmem:[%s2 + $0x60] sm:$0xff]
          %v888 = vld [vmem:[%s2 + $0x68] sm:$0xff]
          %v889 = vld [vmem:[%s2 + $0x70] sm:$0xff]
          %v890 = vld [vmem:[%s2 + $0x78] sm:$0xff]
          %v907 = vunpack.c.l.b16 %v875
          %v908 = vunpack.c.h.b16 %v875
          %v909 = vunpack.c.l.b16 %v876
          %v910 = vunpack.c.h.b16 %v876
          %v911 = vunpack.c.l.b16 %v877
          %v912 = vunpack.c.h.b16 %v877
          %v913 = vunpack.c.l.b16 %v878
          %v914 = vunpack.c.h.b16 %v878
          %v915 = vunpack.c.l.b16 %v879
          %v916 = vunpack.c.h.b16 %v879
          %v917 = vunpack.c.l.b16 %v880
          %v918 = vunpack.c.h.b16 %v880
          %v919 = vunpack.c.l.b16 %v881
          %v920 = vunpack.c.h.b16 %v881
          %v921 = vunpack.c.l.b16 %v882
          %v922 = vunpack.c.h.b16 %v882
          %v923 = vunpack.c.l.b16 %v883
          %v924 = vunpack.c.h.b16 %v883
          %v925 = vunpack.c.l.b16 %v884
          %v926 = vunpack.c.h.b16 %v884
          %v927 = vunpack.c.l.b16 %v885
          %v928 = vunpack.c.h.b16 %v885
          %v929 = vunpack.c.l.b16 %v886
          %v930 = vunpack.c.h.b16 %v886
          %v931 = vunpack.c.l.b16 %v887
          %v932 = vunpack.c.h.b16 %v887
          %v933 = vunpack.c.l.b16 %v888
          %v934 = vunpack.c.h.b16 %v888
          %v935 = vunpack.c.l.b16 %v889
          %v936 = vunpack.c.h.b16 %v889
          %v937 = vunpack.c.l.b16 %v890
          %v938 = vunpack.c.h.b16 %v890
          %v939 = vpack.c.b16 %v909, %v907
          %v940 = vpack.c.b16 %v910, %v908
          %v941 = vpack.c.b16 %v913, %v911
          %v942 = vpack.c.b16 %v914, %v912
          %v943 = vpack.c.b16 %v917, %v915
          %v944 = vpack.c.b16 %v918, %v916
          %v945 = vpack.c.b16 %v921, %v919
          %v946 = vpack.c.b16 %v922, %v920
          %v947 = vpack.c.b16 %v925, %v923
          %v948 = vpack.c.b16 %v926, %v924
          %v949 = vpack.c.b16 %v929, %v927
          %v950 = vpack.c.b16 %v930, %v928
          %v951 = vpack.c.b16 %v933, %v931
          %v952 = vpack.c.b16 %v934, %v932
          %v953 = vpack.c.b16 %v937, %v935
          %v954 = vpack.c.b16 %v938, %v936
          %971 = vmatpush.bf16.msra.mxu0 %v953
          %972 = vmatpush.bf16.msra.mxu0 %v951
          %973 = vmatpush.bf16.msra.mxu0 %v949
          %974 = vmatpush.bf16.msra.mxu0 %v947
          %975 = vmatpush.bf16.msra.mxu0 %v945
          %976 = vmatpush.bf16.msra.mxu0 %v943
          %977 = vmatpush.bf16.msra.mxu0 %v941
          %978 = vmatpush.bf16.msra.mxu0 %v939
          %979 = vmatmul.bf16.gmra.mxu0 %v867
          %v980 = vpop.f32.mrf.mxu0
          %v981 = vadd.f32 0.0, %v980
          %v982 = vpop.f32.mrf.mxu0
          %v983 = vadd.f32 0.0, %v982
          %984 = vmatmul.bf16.gmra.mxu0 %v868
          %v985 = vpop.f32.mrf.mxu0
          %v986 = vadd.f32 0.0, %v985
          %v987 = vpop.f32.mrf.mxu0
          %v988 = vadd.f32 0.0, %v987
          %989 = vmatmul.bf16.gmra.mxu0 %v869
          %v990 = vpop.f32.mrf.mxu0
          %v991 = vadd.f32 0.0, %v990
          %v992 = vpop.f32.mrf.mxu0
          %v993 = vadd.f32 0.0, %v992
          %994 = vmatmul.bf16.gmra.mxu0 %v870
          %v995 = vpop.f32.mrf.mxu0
          %v996 = vadd.f32 0.0, %v995
          %v997 = vpop.f32.mrf.mxu0
          %v998 = vadd.f32 0.0, %v997
          %999 = vmatmul.bf16.gmra.mxu0 %v871
          %v1000 = vpop.f32.mrf.mxu0
          %v1001 = vadd.f32 0.0, %v1000
          %v1002 = vpop.f32.mrf.mxu0
          %v1003 = vadd.f32 0.0, %v1002
          %1004 = vmatmul.bf16.gmra.mxu0 %v872
          %v1005 = vpop.f32.mrf.mxu0
          %v1006 = vadd.f32 0.0, %v1005
          %v1007 = vpop.f32.mrf.mxu0
          %v1008 = vadd.f32 0.0, %v1007
          %1009 = vmatmul.bf16.gmra.mxu0 %v873
          %v1010 = vpop.f32.mrf.mxu0
          %v1011 = vadd.f32 0.0, %v1010
          %v1012 = vpop.f32.mrf.mxu0
          %v1013 = vadd.f32 0.0, %v1012
          %1014 = vmatmul.bf16.gmra.mxu0 %v874
          %v1015 = vpop.f32.mrf.mxu0
          %v1016 = vadd.f32 0.0, %v1015
          %v1017 = vpop.f32.mrf.mxu0
          %v1018 = vadd.f32 0.0, %v1017
          %1019 = vdwg.mxu0
          %1020 = vmatpush.bf16.msra.mxu0 %v954
          %1021 = vmatpush.bf16.msra.mxu0 %v952
          %1022 = vmatpush.bf16.msra.mxu0 %v950
          %1023 = vmatpush.bf16.msra.mxu0 %v948
          %1024 = vmatpush.bf16.msra.mxu0 %v946
          %1025 = vmatpush.bf16.msra.mxu0 %v944
          %1026 = vmatpush.bf16.msra.mxu0 %v942
          %1027 = vmatpush.bf16.msra.mxu0 %v940
          %1028 = vmatmul.bf16.gmra.mxu0 %v867
          %v1029 = vpop.f32.mrf.mxu0
          %v1030 = vadd.f32 0.0, %v1029
          %v1031 = vpop.f32.mrf.mxu0
          %v1032 = vadd.f32 0.0, %v1031
          %1033 = vmatmul.bf16.gmra.mxu0 %v868
          %v1034 = vpop.f32.mrf.mxu0
          %v1035 = vadd.f32 0.0, %v1034
          %v1036 = vpop.f32.mrf.mxu0
          %v1037 = vadd.f32 0.0, %v1036
          %1038 = vmatmul.bf16.gmra.mxu0 %v869
          %v1039 = vpop.f32.mrf.mxu0
          %v1040 = vadd.f32 0.0, %v1039
          %v1041 = vpop.f32.mrf.mxu0
          %v1042 = vadd.f32 0.0, %v1041
          %1043 = vmatmul.bf16.gmra.mxu0 %v870
          %v1044 = vpop.f32.mrf.mxu0
          %v1045 = vadd.f32 0.0, %v1044
          %v1046 = vpop.f32.mrf.mxu0
          %v1047 = vadd.f32 0.0, %v1046
          %1048 = vmatmul.bf16.gmra.mxu0 %v871
          %v1049 = vpop.f32.mrf.mxu0
          %v1050 = vadd.f32 0.0, %v1049
          %v1051 = vpop.f32.mrf.mxu0
          %v1052 = vadd.f32 0.0, %v1051
          %1053 = vmatmul.bf16.gmra.mxu0 %v872
          %v1054 = vpop.f32.mrf.mxu0
          %v1055 = vadd.f32 0.0, %v1054
          %v1056 = vpop.f32.mrf.mxu0
          %v1057 = vadd.f32 0.0, %v1056
          %1058 = vmatmul.bf16.gmra.mxu0 %v873
          %v1059 = vpop.f32.mrf.mxu0
          %v1060 = vadd.f32 0.0, %v1059
          %v1061 = vpop.f32.mrf.mxu0
          %v1062 = vadd.f32 0.0, %v1061
          %1063 = vmatmul.bf16.gmra.mxu0 %v874
          %v1064 = vpop.f32.mrf.mxu0
          %v1065 = vadd.f32 0.0, %v1064
          %v1066 = vpop.f32.mrf.mxu0
          %v1067 = vadd.f32 0.0, %v1066
          %1068 = vdwg.mxu0
          %1069 = vst [vmem:[%s207] sm:$0xff] %v981
          %1070 = vst [vmem:[%s207 + $0x8] sm:$0xff] %v1030
          %1071 = vst [vmem:[%s207 + $0x10] sm:$0xff] %v983
          %1072 = vst [vmem:[%s207 + $0x18] sm:$0xff] %v1032
          %1073 = vst [vmem:[%s207 + $0x20] sm:$0xff] %v986
          %1074 = vst [vmem:[%s207 + $0x28] sm:$0xff] %v1035
          %1075 = vst [vmem:[%s207 + $0x30] sm:$0xff] %v988
          %1076 = vst [vmem:[%s207 + $0x38] sm:$0xff] %v1037
          %1077 = vst [vmem:[%s207 + $0x40] sm:$0xff] %v991
          %1078 = vst [vmem:[%s207 + $0x48] sm:$0xff] %v1040
          %1079 = vst [vmem:[%s207 + $0x50] sm:$0xff] %v993
          %1080 = vst [vmem:[%s207 + $0x58] sm:$0xff] %v1042
          %1081 = vst [vmem:[%s207 + $0x60] sm:$0xff] %v996
          %1082 = vst [vmem:[%s207 + $0x68] sm:$0xff] %v1045
          %1083 = vst [vmem:[%s207 + $0x70] sm:$0xff] %v998
          %1084 = vst [vmem:[%s207 + $0x78] sm:$0xff] %v1047
          %1085 = vst [vmem:[%s207 + $0x80] sm:$0xff] %v1001
          %1086 = vst [vmem:[%s207 + $0x88] sm:$0xff] %v1050
          %1087 = vst [vmem:[%s207 + $0x90] sm:$0xff] %v1003
          %1088 = vst [vmem:[%s207 + $0x98] sm:$0xff] %v1052
          %1089 = vst [vmem:[%s207 + $0xa0] sm:$0xff] %v1006
          %1090 = vst [vmem:[%s207 + $0xa8] sm:$0xff] %v1055
          %1091 = vst [vmem:[%s207 + $0xb0] sm:$0xff] %v1008
          %1092 = vst [vmem:[%s207 + $0xb8] sm:$0xff] %v1057
          %1093 = vst [vmem:[%s207 + $0xc0] sm:$0xff] %v1011
          %1094 = vst [vmem:[%s207 + $0xc8] sm:$0xff] %v1060
          %1095 = vst [vmem:[%s207 + $0xd0] sm:$0xff] %v1013
          %1096 = vst [vmem:[%s207 + $0xd8] sm:$0xff] %v1062
          %1097 = vst [vmem:[%s207 + $0xe0] sm:$0xff] %v1016
          %1098 = vst [vmem:[%s207 + $0xe8] sm:$0xff] %v1065
          %1099 = vst [vmem:[%s207 + $0xf0] sm:$0xff] %v1018
          %1100 = vst [vmem:[%s207 + $0xf8] sm:$0xff] %v1067
        $region44: #{lora_forward.1} parent=31 // pred_fallthru
          _
        %s1101 = sand.u32 %s110, 1
        %s1102 = scalar_lea.sflag [#allocation5], %s1101
        %s1103 = sand.u32 %s110, 1
        %s1104 = smul.addr %s1103, 256
        %s1105 = scalar_lea.vmem [#allocation6], %s1104
        // Predicated region
        $region45: #{lora_forward.1} parent=31 // pred_check
          %p1106 = pneg %p120
        $region46: #{lora_forward.1} parent=31 // pred_check_branch
          %1108 = sbr.rel (%p1106) target = $region48
        $region47: #{lora_forward.1} parent=31 // pred_region
          %s1109 = smul.u32 16, %s24
          %1111 = vsyncadd %s1102, 0
          %s1112 = smul.addr %s1109, 2
          %s1113 = smul.addr %s1112, 8
          %s1114 = scalar_lea.hbm %s3, %s1113
          %s1115 = sshll.u32 %s1105, 4
          %s1116 = int_to_ptr.vmem [resolvable:$true] %s1115
          %s1117 = sshll.u32 %s1114, 4
          %s1118 = int_to_ptr.hbm [resolvable:$true] %s1117
          %1123 = dma.vmem_to_hbm [thread:$0]  %s1116, 4096, %s1118, %s1102, 256, 256, 16
        $region48: #{lora_forward.1} parent=31 // pred_fallthru
          _
      $region32: #{lora_forward.1} parent=5 // pred_fallthru
        _
      %p1124 = scmp.le.s32.totalorder 2, %s15
      // Predicated region
      $region49: #{lora_forward.1} parent=5 // pred_check
        %p1125 = pneg %p1124
      $region50: #{lora_forward.1} parent=5 // pred_check_branch
        %1127 = sbr.rel (%p1125) target = $region52
      $region51: #{lora_forward.1} parent=5 // pred_region
        %s1128 = ssub.s32 %s15, 2
        // Predicated region
        $region53: #{lora_forward.1} parent=51 // pred_check
          %p1129 = pneg %p126
        $region54: #{lora_forward.1} parent=51 // pred_check_branch
          %1131 = sbr.rel (%p1129) target = $region56
        $region55: #{lora_forward.1} parent=51 // pred_region
          %s1132 = sand.u32 %s111, 1
          %s1133 = scalar_lea.sflag [#allocation5], %s1132
          %s1134 = sand.u32 %s111, 1
          %s1135 = smul.addr %s1134, 256
          %s1136 = scalar_lea.vmem [#allocation6], %s1135
          %1138 = dma.done %s1133, 4096
        $region56: #{lora_forward.1} parent=51 // pred_fallthru
          _
      $region52: #{lora_forward.1} parent=5 // pred_fallthru
        _
    $region6: #{lora_forward.1} parent=1 // loop_footer
      %s19 = sadd.s32 1, %s15
    $region7: #{lora_forward.1} parent=1 // loop_footer_branch
      %14 = sbr.rel target = $region3
    $region8: #{lora_forward.1} parent=1 // loop_exit
      _
    %1139 = vsyncpa [#allocation4], 1
    %s1140 = scalar_lea.sflag [#allocation4], 1
    %1141 = vsyncpa %s1140, 1
    %1142 = vsyncpa [#allocation5], 1
    %s1143 = scalar_lea.sflag [#allocation5], 1
    %1144 = vsyncpa %s1143, 1

</llo_original>
